<compile_context>
chip_gen: v7x
topology: tpu7x:2x2x1
jax: 0.10.0
libtpu: 0.0.40
codegen_flags: <defaults>
</compile_context>

<pallas_src>
import functools

import jax
import jax.numpy as jnp
from jax.experimental import pallas as pl
from jax.experimental.pallas import tpu as pltpu


_TARGET_STEP_BYTES = 8 * 1024 * 1024   # input block + output block, per grid step
_VMEM_LIMIT_BYTES = 32 * 1024 * 1024   # > v5e 16MiB scoped default, <= v7x 64MiB physical
_OUT_ROW_BYTES = 8 * 4                 # (1, tp) int32 output block pads to 8 sublanes


def _round_up(v, m):
    return ((v + m - 1) // m) * m


def _sublane_pack(itemsize):
    # VMEM tiles are (8,128) f32 / (16,128) bf16 / (32,128) int8-fp8.
    return {4: 8, 2: 16, 1: 32}.get(itemsize, 8)


def _pixel_mask_kernel(x_ref, cnt_ref, *, threshold, block_rows, total_rows, mask_rows):
    """Count |x| > threshold along the batch (sublane) axis, accumulating across
    batch grid steps into the resident (1, tp) int32 output block."""
    # Zero the accumulator on the first batch step (P3 init pattern).
    @pl.when(pl.program_id(1) == 0)
    def _():
        cnt_ref[...] = jnp.zeros_like(cnt_ref)

    x = x_ref[...]                                              # (block_rows, tp)
    active = jnp.abs(x) > jnp.asarray(threshold, x.dtype)       # compare in native dtype
    if mask_rows:
        # Ragged batch tail: rows >= total_rows in the boundary block hold
        # uninitialized VMEM; mask them so they contribute 0.
        row_ids = (jax.lax.broadcasted_iota(jnp.int32, x.shape, 0)
                   + pl.program_id(1) * block_rows)
        active = jnp.logical_and(active, row_ids < total_rows)
    # Sum the boolean mask directly into int32 (no full int32 copy of the block).
    cnt_ref[...] += jnp.sum(active, axis=0, dtype=jnp.int32, keepdims=True)


def _choose_tiles(n, p, itemsize, target_step_bytes):
    """Pick (batch_tile, lane_tile) so that the *physical* VMEM footprint of one
    grid step (sublane-padded input block + int32 output block) stays near
    target_step_bytes while keeping lane tiles >= 512 where possible."""
    pack = _sublane_pack(itemsize)
    p128 = _round_up(max(p, 1), 128)

    # --- try the full batch in one block (lane-only grid, no accumulation) ---
    denom_full = _round_up(n, pack) * itemsize + _OUT_ROW_BYTES
    tp_full = (target_step_bytes // denom_full) // 128 * 128
    if tp_full >= min(p128, 512):
        tn = n
        tp = min(tp_full, p128)
    else:
        # --- large N: tile the batch, accumulate into a resident output block ---
        tp_budget = max(128, (target_step_bytes
                              // (pack * itemsize + _OUT_ROW_BYTES)) // 128 * 128)
        tp = min(p128, 2048, tp_budget)          # >=512-lane tiles, >=2KiB contiguous rows
        tn_budget = (target_step_bytes - _OUT_ROW_BYTES * tp) // (tp * itemsize)
        tn = max(pack, (tn_budget // pack) * pack)
        if tn >= n:
            tn = n

    # v7x has 2 TensorCores: give the "parallel" lane axis >= 2 grid steps when
    # the whole problem would otherwise fit in a single block.
    if tn == n and -(-p // tp) == 1 and p128 >= 256:
        tp = _round_up(-(-p128 // 2), 128)

    return tn, tp


def pixel_mask_counts(x, threshold=0.0, *, target_step_bytes=_TARGET_STEP_BYTES):
    """int32 array of shape x.shape[1:]: sum over batch of (|x| > threshold)."""
    n = int(x.shape[0])
    rest_shape = x.shape[1:]
    p = 1
    for d in rest_shape:
        p *= int(d)

    x2d = x.reshape(n, p)   # contiguous reshape: no HBM copy

    itemsize = jnp.dtype(x.dtype).itemsize
    tn, tp = _choose_tiles(n, p, itemsize, target_step_bytes)
    lane_blocks = pl.cdiv(p, tp)
    batch_blocks = pl.cdiv(n, tn)
    mask_rows = (tn != n) and (n % tn != 0)

    kernel = functools.partial(
        _pixel_mask_kernel,
        threshold=float(threshold),
        block_rows=tn,
        total_rows=n,
        mask_rows=mask_rows,
    )

    counts2d = pl.pallas_call(
        kernel,
        out_shape=jax.ShapeDtypeStruct((1, p), jnp.int32),
        grid_spec=pltpu.PrefetchScalarGridSpec(
            num_scalar_prefetch=0,
            grid=(lane_blocks, batch_blocks),           # reduction (batch) axis last
            in_specs=[pl.BlockSpec((tn, tp), lambda j, b: (b, j))],
            out_specs=pl.BlockSpec((1, tp), lambda j, b: (0, j)),   # resident across b
        ),
        compiler_params=pltpu.CompilerParams(
            dimension_semantics=("parallel", "arbitrary"),
            vmem_limit_bytes=_VMEM_LIMIT_BYTES,
        ),
    )(x2d)

    return counts2d[0].reshape(rest_shape)


class PixelMaskLogger:
    """JAX/Pallas analogue of the PyTorch PixelMaskLogger (stateful counters)."""

    _id = 1

    def __init__(self, threshold=0.0, name="", enabled=False):
        self.name = name
        self.enabled = enabled
        self.added_id = False
        self.channels = None
        self.n_samples = 0
        self.threshold = float(threshold)

    def enable_logging(self):
        self.enabled = True

    def disable_logging(self):
        self.enabled = False

    def reset(self):
        self.channels = None
        self.n_samples = 0

    def __call__(self, x):
        if not self.added_id:
            self.name = f"{PixelMaskLogger._id} {self.name}"
            PixelMaskLogger._id += 1
            self.added_id = True
        if self.enabled:
            counts = pixel_mask_counts(x, self.threshold)
            if self.channels is None:
                # torch.zeros_like(x[0]) keeps x's dtype -> float accumulator.
                # TODO(synk): counts in low-precision dtypes (bf16) lose exactness
                # above ~256; torch has the same accumulator dtype, so we match it.
                self.channels = jnp.zeros(x.shape[1:], dtype=x.dtype)
            self.channels = self.channels + counts.astype(self.channels.dtype)
            self.n_samples += int(x.shape[0])
        # Identity pass-through: no kernel copy of x (halves HBM traffic).
        return x

    def get(self):
        return self.channels / self.n_samples


if __name__ == "__main__":
    key = jax.random.PRNGKey(0)

    # NCHW input consistent with a conv feature map; C*H*W = 1024 (lane-dense).
    x = jax.random.normal(key, (2, 4, 16, 16), dtype=jnp.float32)
    x = jnp.where(jnp.abs(x) < 0.5, 0.0, x)  # make the threshold test non-trivial

    logger = PixelMaskLogger(threshold=0.0, name="pixel_mask", enabled=True)
    y = logger(x)
    y = jax.block_until_ready(y)
    ch = jax.block_until_ready(logger.channels)

    # Reference check in plain JAX.
    ref = jnp.sum((jnp.abs(x) > 0.0), axis=0).astype(x.dtype)
    assert y is x, "forward must be the identity pass-through"
    assert jnp.array_equal(ch, ref), "channel mask counts mismatch"
    assert logger.n_samples == x.shape[0]

    # Second call exercises accumulation across calls (matches torch +=).
    x2 = jax.random.normal(jax.random.PRNGKey(1), (2, 4, 16, 16), dtype=jnp.float32)
    _ = jax.block_until_ready(logger(x2))
    ref2 = ref + jnp.sum((jnp.abs(x2) > 0.0), axis=0).astype(x.dtype)
    assert jnp.array_equal(jax.block_until_ready(logger.channels), ref2)
    assert logger.n_samples == 4

    # Odd (non-128-multiple) flattened size exercises the partial-lane-block
    # path (no jnp.pad copy of x anymore).
    x3 = jax.random.normal(jax.random.PRNGKey(2), (2, 3, 5, 7), dtype=jnp.float32)
    logger2 = PixelMaskLogger(threshold=0.1, name="odd", enabled=True)
    _ = jax.block_until_ready(logger2(x3))
    ref3 = jnp.sum((jnp.abs(x3) > 0.1), axis=0).astype(x3.dtype)
    assert jnp.array_equal(jax.block_until_ready(logger2.channels), ref3)

    # Force the batch-tiled accumulation path (2x2 grid, ragged batch tail,
    # partial lane block) with a tiny per-step byte budget.
    x4 = jax.random.normal(jax.random.PRNGKey(3), (10, 3, 16, 16), dtype=jnp.float32)
    c4 = jax.block_until_ready(
        pixel_mask_counts(x4, 0.2, target_step_bytes=40000))
    ref4 = jnp.sum(jnp.abs(x4) > 0.2, axis=0, dtype=jnp.int32)
    assert jnp.array_equal(c4, ref4), "batch-tiled accumulation mismatch"

    # bf16 exercises the 16-row sublane pack sizing and native-dtype compare.
    x5 = x.astype(jnp.bfloat16)
    c5 = jax.block_until_ready(pixel_mask_counts(x5, 0.25))
    ref5 = jnp.sum(jnp.abs(x5) > jnp.asarray(0.25, jnp.bfloat16),
                   axis=0, dtype=jnp.int32)
    assert jnp.array_equal(c5, ref5), "bf16 counts mismatch"

    _ = jax.block_until_ready(logger.get())
    print("KERNEL_OK")
</pallas_src>

<mosaic_0001>
module attributes {stable_mosaic.version = 11 : i64} {
  func.func @_pixel_mask_kernel(%arg0: i32, %arg1: i32, %arg2: memref<2x512xf32, #tpu.memory_space<vmem>>, %arg3: memref<1x512xi32, #tpu.memory_space<vmem>>) attributes {dimension_semantics = [#tpu.dimension_semantics<parallel>, #tpu.dimension_semantics<arbitrary>], iteration_bounds = array<i64: 2, 1>, scalar_prefetch = 0 : i64, scratch_operands = 0 : i64, tpu.core_type = #tpu.core_type<tc>, window_params = [{transform_indices = @transform_0, window_bounds = array<i64: 2, 512>}, {transform_indices = @transform_1, window_bounds = array<i64: 1, 512>}]} {
    %c0_i32 = arith.constant 0 : i32
    %0 = arith.cmpi eq, %arg1, %c0_i32 : i32
    %1 = arith.extui %0 : i1 to i32
    %c0_i32_0 = arith.constant 0 : i32
    %2 = arith.cmpi ne, %1, %c0_i32_0 : i32
    scf.if %2 {
      %c0_i32_7 = arith.constant 0 : i32
      %13 = vector.broadcast %c0_i32_7 : i32 to vector<1x512xi32>
      %c0_8 = arith.constant 0 : index
      %c0_9 = arith.constant 0 : index
      %14 = vector.load %arg3[%c0_8, %c0_9] : memref<1x512xi32, #tpu.memory_space<vmem>>, vector<1x512xi32>
      tpu.vector_store %arg3[%c0_8, %c0_9], %13 {strides = array<i32>} : memref<1x512xi32, #tpu.memory_space<vmem>>, vector<1x512xi32>,
    } else {
    }
    %c0 = arith.constant 0 : index
    %c0_1 = arith.constant 0 : index
    %3 = vector.load %arg2[%c0, %c0_1] : memref<2x512xf32, #tpu.memory_space<vmem>>, vector<2x512xf32>
    %4 = math.absf %3 : vector<2x512xf32>
    %cst = arith.constant 0.000000e+00 : f32
    %5 = vector.broadcast %cst : f32 to vector<2x512xf32>
    %6 = arith.cmpf ogt, %4, %5 : vector<2x512xf32>
    %c0_2 = arith.constant 0 : index
    %c0_3 = arith.constant 0 : index
    %7 = vector.load %arg3[%c0_2, %c0_3] : memref<1x512xi32, #tpu.memory_space<vmem>>, vector<1x512xi32>
    %8 = arith.extui %6 : vector<2x512xi1> to vector<2x512xi32>
    %cst_4 = arith.constant dense<0> : vector<512xi32>
    %9 = vector.multi_reduction <add>, %8, %cst_4 [0] : vector<2x512xi32> to vector<512xi32>
    %10 = vector.shape_cast %9 : vector<512xi32> to vector<1x512xi32>
    %11 = arith.addi %7, %10 : vector<1x512xi32>
    %c0_5 = arith.constant 0 : index
    %c0_6 = arith.constant 0 : index
    %12 = vector.load %arg3[%c0_5, %c0_6] : memref<1x512xi32, #tpu.memory_space<vmem>>, vector<1x512xi32>
    tpu.vector_store %arg3[%c0_5, %c0_6], %11 {strides = array<i32>} : memref<1x512xi32, #tpu.memory_space<vmem>>, vector<1x512xi32>,
    return
  }
  func.func @transform_0(%arg0: i32, %arg1: i32) -> (i32, i32) {
    %c0_i32 = arith.constant 0 : i32
    return %arg1, %arg0 : i32, i32
  }
  func.func @transform_1(%arg0: i32, %arg1: i32) -> (i32, i32) {
    %c0_i32 = arith.constant 0 : i32
    %c0_i32_0 = arith.constant 0 : i32
    return %c0_i32, %arg0 : i32, i32
  }
}

</mosaic_0001>

<llo_original>
// kernel: tpu_custom_call.1
$region0: #{tpu_custom_call.1}
  #allocation0 [shape = 'u32[]', space=smem, size = 0x4, offset = 0x4, fixed_abs, tag = 'smem constant byte address 0x4 - core index']
  #allocation1 [shape = 'u32[144,128]{1,0:T(1,128)}', space=vmem, size = 0x12000, scoped, tag = 'internal scratch']
  %s0 = inlined_call_operand.hbm [shape: f32[2,1024], index: 0, kind: input, shape index: {}]
  %s1 = inlined_call_operand.hbm [shape: s32[1,1024], index: 1, kind: output, shape index: {}]
  %s2 = sld [smem:[#allocation0]]
  $region45: #{tpu_custom_call.1} parent=0
    _
  %s4 = ssub.s32 1, %s2
  %s5 = scalar_select 0, %s4, %s2
  $region1: #{tpu_custom_call.1} parent=0
    #allocation2 [shape = 'u8[8192]{0}', space=vmem, size = 0x2000, scoped, tag = 'input window, operand 0']
    #allocation3 [shape = 's32[2]{0}', space=sflag, size = 0x8, scoped, tag = 'scoped memory for tpu_custom_call.1']
    #allocation4 [shape = 's32[2]{0}', space=sflag, size = 0x8, scoped, tag = 'scoped memory for tpu_custom_call.1']
    #allocation5 [shape = 'u8[4096]{0}', space=vmem, size = 0x1000, scoped, tag = 'output window, operand 0']
    %6 = vsyncpa [#allocation3], 0
    %s7 = scalar_lea.sflag [#allocation3], 1
    %8 = vsyncpa %s7, 0
    %9 = vsyncpa [#allocation4], 0
    %s10 = scalar_lea.sflag [#allocation4], 1
    %11 = vsyncpa %s10, 0
    loop: start=0, step=1, limit=4
    $region2: #{tpu_custom_call.1} parent=1 // loop_pre_header
      _
    $region3: #{tpu_custom_call.1} parent=1 // loop_header
      %s13 = sphi 0, %s17
      %p14 = scmp.ge.s32.totalorder %s13, 4
      %s20 = sphi 0, %s32
      %s21 = sphi 0, %s28
      %s22 = sphi 0, %s20
      %s23 = sphi 0, %s21
      %s24 = sphi 0, %s22
      %s25 = sphi 0, %s23
      %s37 = sphi 0, %s39
      %s40 = sphi 0, %s37
      %s41 = sphi 0, %s40
      %s57 = sphi 0, %s41
      %s63 = sphi 0, %s65
      %s66 = sphi 0, %s63
      %s67 = sphi 0, %s66
      %s83 = sphi 0, %s67
    $region4: #{tpu_custom_call.1} parent=1 // loop_header_branch
      %16 = sbr.rel (%p14) target = $region8
    $region5: #{tpu_custom_call.1} parent=1 // loop_body
      %s18 = ssub.s32 %s13, 1
      %s19 = ssub.s32 %s13, 2
      %s26 = sadd.s32 1, %s21
      %p27 = scmp.ge.s32.totalorder %s26, 1
      %s28 = scalar_select %p27, 0, %s26
      %s29 = sadd.s32 1, %s20
      %s30 = scalar_select %p27, %s29, %s20
      %p31 = scmp.ge.s32.totalorder %s30, 2
      %s32 = scalar_select %p31, 0, %s30
      %s33 = ssub.s32 %s21, %s28
      %s34 = ssub.s32 %s20, %s32
      %s35 = sor.u32 %s33, %s34
      %p36 = scmp.eq.s32.totalorder %s35, 0
      %s38 = sadd.s32 %s37, 1
      %s39 = scalar_select %p36, %s37, %s38
      %p42 = pneg %p36
      %p43 = scmp.eq.s32.totalorder %s13, 1
      %p44 = por %p42, %p43
      %p45 = scmp.ne.s32.totalorder %s37, %s40
      %p46 = scmp.eq.s32.totalorder %s13, 0
      %p47 = por %p45, %p46
      %p48 = scmp.ne.s32.totalorder %s37, %s40
      %p49 = scmp.eq.s32.totalorder %s18, 1
      %p50 = por %p48, %p49
      %p51 = scmp.ne.s32.totalorder %s40, %s41
      %p52 = scmp.eq.s32.totalorder %s18, 0
      %p53 = por %p51, %p52
      %p54 = scmp.ne.s32.totalorder %s40, %s41
      %p55 = scmp.eq.s32.totalorder %s19, 1
      %p56 = por %p54, %p55
      %p58 = scmp.ne.s32.totalorder %s41, %s57
      %p59 = scmp.eq.s32.totalorder %s19, 0
      %p60 = por %p58, %p59
      %s61 = ssub.s32 %s20, %s32
      %p62 = scmp.eq.s32.totalorder %s61, 0
      %s64 = sadd.s32 %s63, 1
      %s65 = scalar_select %p62, %s63, %s64
      %p68 = pneg %p62
      %p69 = scmp.eq.s32.totalorder %s13, 1
      %p70 = por %p68, %p69
      %p71 = scmp.ne.s32.totalorder %s63, %s66
      %p72 = scmp.eq.s32.totalorder %s13, 0
      %p73 = por %p71, %p72
      %p74 = scmp.ne.s32.totalorder %s63, %s66
      %p75 = scmp.eq.s32.totalorder %s18, 1
      %p76 = por %p74, %p75
      %p77 = scmp.ne.s32.totalorder %s66, %s67
      %p78 = scmp.eq.s32.totalorder %s18, 0
      %p79 = por %p77, %p78
      %p80 = scmp.ne.s32.totalorder %s66, %s67
      %p81 = scmp.eq.s32.totalorder %s19, 1
      %p82 = por %p80, %p81
      %p84 = scmp.ne.s32.totalorder %s67, %s83
      %p85 = scmp.eq.s32.totalorder %s19, 0
      %p86 = por %p84, %p85
      %p87 = scmp.le.s32.totalorder 1, %s13
      %p88 = scmp.lt.s32.totalorder %s13, 3
      %p89 = pnand %p87, %p88
      %p90 = pneg %p89
      // Predicated region
      $region9: #{tpu_custom_call.1} parent=5 // pred_check
        _
      $region10: #{tpu_custom_call.1} parent=5 // pred_check_branch
        %92 = sbr.rel (%p89) target = $region12
      $region11: #{tpu_custom_call.1} parent=5 // pred_region
        %s93 = ssub.s32 %s13, 1
      $region12: #{tpu_custom_call.1} parent=5 // pred_fallthru
        _
      %p94 = scmp.lt.s32.totalorder %s13, 2
      // Predicated region
      $region13: #{tpu_custom_call.1} parent=5 // pred_check
        %p95 = pneg %p94
      $region14: #{tpu_custom_call.1} parent=5 // pred_check_branch
        %97 = sbr.rel (%p95) target = $region16
      $region15: #{tpu_custom_call.1} parent=5 // pred_region
        // Predicated region
        $region17: #{tpu_custom_call.1} parent=15 // pred_check
          %p98 = pneg %p47
        $region18: #{tpu_custom_call.1} parent=15 // pred_check_branch
          %100 = sbr.rel (%p98) target = $region20
        $region19: #{tpu_custom_call.1} parent=15 // pred_region
          %s101 = sand.u32 %s37, 1
          %s102 = scalar_lea.sflag [#allocation3], %s101
          %s103 = sand.u32 %s37, 1
          %s104 = smul.addr %s103, 8
          %s105 = scalar_lea.vmem [#allocation2], %s104
          %s106 = smul.u32 4, %s20
          %s108 = ssub.s32 128, 128
          %109 = vsyncadd %s102, %s108
          %s110 = smul.addr %s21, 8
          %s111 = sadd.s32 %s106, %s110
          %s112 = smul.addr %s111, 32
          %s113 = scalar_lea.hbm %s0, %s112
          %s115 = sshll.u32 %s105, 4
          %s116 = int_to_ptr.vmem [resolvable:$true] %s115
          %118 = dma.hbm_to_vmem [thread:$0]  %s113, 128, %s116, %s102
        $region20: #{tpu_custom_call.1} parent=15 // pred_fallthru
          _
      $region16: #{tpu_custom_call.1} parent=5 // pred_fallthru
        _
      %p119 = scmp.le.s32.totalorder 1, %s13
      %p120 = scmp.lt.s32.totalorder %s13, 3
      %p121 = pnand %p119, %p120
      %p122 = pneg %p121
      // Predicated region
      $region21: #{tpu_custom_call.1} parent=5 // pred_check
        _
      $region22: #{tpu_custom_call.1} parent=5 // pred_check_branch
        %124 = sbr.rel (%p121) target = $region24
      $region23: #{tpu_custom_call.1} parent=5 // pred_region
        %s125 = ssub.s32 %s13, 1
        %s126 = sand.u32 %s40, 1
        %s127 = scalar_lea.sflag [#allocation3], %s126
        %s128 = sand.u32 %s40, 1
        %s129 = smul.addr %s128, 8
        %s130 = scalar_lea.vmem [#allocation2], %s129
        // Predicated region
        $region25: #{tpu_custom_call.1} parent=23 // pred_check
          %p131 = pneg %p53
        $region26: #{tpu_custom_call.1} parent=23 // pred_check_branch
          %133 = sbr.rel (%p131) target = $region28
        $region27: #{tpu_custom_call.1} parent=23 // pred_region
          %134 = dma.done %s127, 128
        $region28: #{tpu_custom_call.1} parent=23 // pred_fallthru
          _
        %s135 = sand.u32 %s40, 1
        %s136 = scalar_lea.sflag [#allocation3], %s135
        %s137 = sand.u32 %s40, 1
        %s138 = smul.addr %s137, 8
        %s139 = scalar_lea.vmem [#allocation2], %s138
        %p140 = pneg %p53
        %p141 = pneg %p50
        %p142 = pneg %p79
        %p143 = pneg %p76
        %s144 = sand.u32 %s66, 1
        %s145 = scalar_lea.sflag [#allocation4], %s144
        %s146 = sand.u32 %s66, 1
        %s147 = smul.addr %s146, 4
        %s148 = scalar_lea.vmem [#allocation5], %s147
        %s149 = smul.u32 4, %s22
        %s150 = smul.u32 4, %s22
        %p151 = scmp.eq.s32.totalorder %s23, 0
        // Predicated region
        $region29: #{tpu_custom_call.1} parent=23 // pred_check
          %p152 = pneg %p151
        $region30: #{tpu_custom_call.1} parent=23 // pred_check_branch
          %154 = sbr.rel (%p152) target = $region32
        $region31: #{tpu_custom_call.1} parent=23 // pred_region
          %v155 = vlaneseq
          %vm156 = vcmp.ge.s32.totalorder %v155, 0
          %vm157 = vcmp.lt.s32.totalorder %v155, 512
          %vm158 = vmand %vm156, %vm157
          %159 = vst.msk [vmem:[%s148] sm:$0xf] %vm158, 0
        $region32: #{tpu_custom_call.1} parent=23 // pred_fallthru
          _
        %v160 = vld [vmem:[%s130] sm:$0xff]
        %v161 = vand.u32 2147483647, %v160
        %vm162 = vcmp.gt.f32.partialorder %v161, 0.0
        %v163 = vld [vmem:[%s148] sm:$0xf]
        %v164 = vsel %vm162, 1, 0
        %v165 = vcombine.high %v164, %v164
        %v167 = vunpack.c.l.s4 1983009808
        %v168 = vunpack.c.0.s8 %v167
        %v169 = vlaneseq
        %v170 = vshrl.u32 %v169, 7
        %v171 = vsub.s32 %v168, %v170
        %v172 = vrot.slane %v164, %v171
        %v174 = vunpack.c.l.s4 1983009808
        %v175 = vunpack.c.0.s8 %v174
        %v176 = vlaneseq
        %v177 = vshrl.u32 %v176, 7
        %v178 = vsub.s32 %v175, %v177
        %v179 = vrot.slane %v165, %v178
        %v180 = vcombine.high %v172, %v172
        %v181 = vcombine.high %v179, %v179
        %vm182 = vcmask 1041408
        %v183 = vsel %vm182, %v172, 0
        %v184 = vrot.slane %v183, 4
        %v185 = vadd.s32 %v183, %v184
        %v186 = vrot.slane %v185, 2
        %v187 = vadd.s32 %v185, %v186
        %v188 = vrot.slane %v187, 1
        %v189 = vadd.s32 %v187, %v188
        %v190 = vsel %vm182, %v180, 0
        %v191 = vrot.slane %v190, 4
        %v192 = vadd.s32 %v190, %v191
        %v193 = vrot.slane %v192, 2
        %v194 = vadd.s32 %v192, %v193
        %v195 = vrot.slane %v194, 1
        %v196 = vadd.s32 %v194, %v195
        %v197 = vsel %vm182, %v179, 0
        %v198 = vrot.slane %v197, 4
        %v199 = vadd.s32 %v197, %v198
        %v200 = vrot.slane %v199, 2
        %v201 = vadd.s32 %v199, %v200
        %v202 = vrot.slane %v201, 1
        %v203 = vadd.s32 %v201, %v202
        %v204 = vsel %vm182, %v181, 0
        %v205 = vrot.slane %v204, 4
        %v206 = vadd.s32 %v204, %v205
        %v207 = vrot.slane %v206, 2
        %v208 = vadd.s32 %v206, %v207
        %v209 = vrot.slane %v208, 1
        %v210 = vadd.s32 %v208, %v209
        %v211 = vcombine.low %v189, %v196
        %v212 = vcombine.low %v203, %v210
        %v214 = vunpack.c.l.s4 1966171168
        %v215 = vunpack.c.0.s8 %v214
        %v216 = vlaneseq
        %v217 = vshrl.u32 %v216, 7
        %v218 = vsub.s32 %v215, %v217
        %v219 = vrot.slane %v211, %v218
        %v221 = vunpack.c.l.s4 1966171168
        %v222 = vunpack.c.0.s8 %v221
        %v223 = vlaneseq
        %v224 = vshrl.u32 %v223, 7
        %v225 = vsub.s32 %v222, %v224
        %v226 = vrot.slane %v212, %v225
        %v227 = vcombine.low %v219, %v226
        %v229 = vunpack.c.l.s4 1966171168
        %v230 = vunpack.c.0.s8 %v229
        %v231 = vlaneseq
        %v232 = vshrl.u32 %v231, 7
        %v233 = vsub.s32 %v230, %v232
        %v234 = vrot.slane %v227, %v233
        %v235 = vadd.s32 %v163, %v234
        %v236 = vlaneseq
        %vm237 = vcmp.ge.s32.totalorder %v236, 0
        %vm238 = vcmp.lt.s32.totalorder %v236, 512
        %vm239 = vmand %vm237, %vm238
        %240 = vst.msk [vmem:[%s148] sm:$0xf] %vm239, %v235
        %s241 = sand.u32 %s66, 1
        %s242 = scalar_lea.sflag [#allocation4], %s241
        %s243 = sand.u32 %s66, 1
        %s244 = smul.addr %s243, 4
        %s245 = scalar_lea.vmem [#allocation5], %s244
        // Predicated region
        $region33: #{tpu_custom_call.1} parent=23 // pred_check
          %p246 = pneg %p76
        $region34: #{tpu_custom_call.1} parent=23 // pred_check_branch
          %248 = sbr.rel (%p246) target = $region36
        $region35: #{tpu_custom_call.1} parent=23 // pred_region
          %s249 = smul.u32 4, %s22
          %s251 = ssub.s32 64, 64
          %252 = vsyncadd %s242, %s251
          %s253 = smul.addr %s249, 16
          %s254 = scalar_lea.hbm %s1, %s253
          %s256 = sshll.u32 %s245, 4
          %s257 = int_to_ptr.vmem [resolvable:$true] %s256
          %259 = dma.vmem_to_hbm [thread:$0]  %s257, 64, %s254, %s242
        $region36: #{tpu_custom_call.1} parent=23 // pred_fallthru
          _
      $region24: #{tpu_custom_call.1} parent=5 // pred_fallthru
        _
      %p260 = scmp.le.s32.totalorder 2, %s13
      // Predicated region
      $region37: #{tpu_custom_call.1} parent=5 // pred_check
        %p261 = pneg %p260
      $region38: #{tpu_custom_call.1} parent=5 // pred_check_branch
        %263 = sbr.rel (%p261) target = $region40
      $region39: #{tpu_custom_call.1} parent=5 // pred_region
        %s264 = ssub.s32 %s13, 2
        // Predicated region
        $region41: #{tpu_custom_call.1} parent=39 // pred_check
          %p265 = pneg %p82
        $region42: #{tpu_custom_call.1} parent=39 // pred_check_branch
          %267 = sbr.rel (%p265) target = $region44
        $region43: #{tpu_custom_call.1} parent=39 // pred_region
          %s268 = sand.u32 %s67, 1
          %s269 = scalar_lea.sflag [#allocation4], %s268
          %s270 = sand.u32 %s67, 1
          %s271 = smul.addr %s270, 4
          %s272 = scalar_lea.vmem [#allocation5], %s271
          %273 = dma.done %s269, 64
        $region44: #{tpu_custom_call.1} parent=39 // pred_fallthru
          _
      $region40: #{tpu_custom_call.1} parent=5 // pred_fallthru
        _
    $region6: #{tpu_custom_call.1} parent=1 // loop_footer
      %s17 = sadd.s32 1, %s13
    $region7: #{tpu_custom_call.1} parent=1 // loop_footer_branch
      %12 = sbr.rel target = $region3
    $region8: #{tpu_custom_call.1} parent=1 // loop_exit
      _
    %274 = vsyncpa [#allocation3], 1
    %s275 = scalar_lea.sflag [#allocation3], 1
    %276 = vsyncpa %s275, 1
    %277 = vsyncpa [#allocation4], 1
    %s278 = scalar_lea.sflag [#allocation4], 1
    %279 = vsyncpa %s278, 1

</llo_original>
